<compile_context>
chip_gen: v7x
topology: tpu7x:2x2x1
jax: 0.10.0
libtpu: 0.0.40
codegen_flags: <defaults>
</compile_context>

<pallas_src>
import math

import jax
import jax.numpy as jnp
from jax import lax
from jax.experimental import pallas as pl
from jax.experimental.pallas import tpu as pltpu

LEAKY_SLOPE = 0.01   # F.leaky_relu default (RedConv.negative_slope is unused in forward)
LAMB = 0.1           # RedConv lamb
RATIO = 0.8          # SAGPool ratio


def _redconv_score_kernel(x_ref, a_ref, p_ref, o_ref, rhs_ref):
    """One graph per grid step.

    x:[N,C] f32, A:[N,N] bf16 0/1 adjacency WITH self loops,
    p:[C+1, H+4] packed params, o:[1, N] final node scores (lane dense),
    rhs:[N, 2H+3] f32 VMEM scratch for the fused A @ [...] push.
    """
    N = a_ref.shape[0]
    C = x_ref.shape[1]
    H = C                                   # RedConv.hidden_channels == in_channels
    f32 = jnp.float32

    x = x_ref[...]                          # [N, C] f32
    A = a_ref[...].astype(f32)              # [N, N] bf16 in HBM -> f32 once in VMEM
    p = p_ref[...]

    # packed params: cols = [ w_gcn(H) | w_root | w_rel | w_key | w_qry ]
    #                rows 0..C-1 weights, row C = [ b_gcn | b_gc | 0 | b_key | b_qry ]
    w_x = p[0:C, 0:H + 2]                   # [C, H+2]  (w_gcn | w_root | w_rel)
    w_kq = p[0:C, H + 2:H + 4]              # [C, 2]    (w_key | w_qry)
    b_gcn = p[C:C + 1, 0:H]                 # [1, H]
    b_gc = p[C:C + 1, H:H + 1]              # [1, 1]
    b_kq = p[C:C + 1, H + 2:H + 4]          # [1, 2]

    ones_col = jnp.ones((N, 1), f32)
    dim00 = (((0,), (0,)), ((), ()))        # contract dim0 with dim0  (A^T . B)

    # ---- single fused x @ [w_gcn | w_root | w_rel] (one MXU push) ------------------
    xw = jnp.dot(x, w_x, preferred_element_type=f32)                         # [N, H+2]
    x_root = xw[:, H:H + 1]                                                  # [N, 1]

    # ---- GCNConv normalisation: in-degree D^-1/2, computed once --------------------
    deg = lax.dot_general(A, ones_col, dim00, preferred_element_type=f32)    # [N, 1]
    dinv = jnp.where(deg > 0.0, lax.rsqrt(deg), 0.0)                         # [N, 1]

    # ---- ONE A^T pass: GCN aggregation fused with GraphConv's rel aggregation ------
    # scale only the gcn columns by dinv; x_root / x_rel columns ride along unscaled.
    col_ids = lax.broadcasted_iota(jnp.int32, (1, H + 2), 1)
    y = xw * jnp.where(col_ids < H, dinv, 1.0)                               # [N, H+2]
    agg = lax.dot_general(A, y, dim00, preferred_element_type=f32)           # [N, H+2]
    x_t = dinv * agg[:, 0:H] + b_gcn                                         # [N, H]
    agg_rel = agg[:, H + 1:H + 2]                                            # [N, 1]

    # ---- key / query scores (depend on the TARGET node only) -----------------------
    s_kq = jnp.dot(x_t, w_kq, preferred_element_type=f32) + b_kq             # [N, 2]
    s_kq = jnp.where(s_kq >= 0.0, s_kq, LEAKY_SLOPE * s_kq)                  # leaky_relu
    # separable softmax: the per-score-type max cancels exactly in num/z
    e_kq = jnp.exp(s_kq - jnp.max(s_kq, axis=0, keepdims=True))              # [N, 2]
    e_k = e_kq[:, 0:1]
    e_q = e_kq[:, 1:2]

    # ---- ONE A pass: both attention numerators, denominators and rowsum(A) ---------
    rhs_ref[:, 0:H] = x_t * e_k
    rhs_ref[:, H:2 * H] = x_t * e_q
    rhs_ref[:, 2 * H:2 * H + 2] = e_kq
    rhs_ref[:, 2 * H + 2:2 * H + 3] = ones_col
    out = jnp.dot(A, rhs_ref[...], preferred_element_type=f32)               # [N, 2H+3]
    num_k = out[:, 0:H]
    num_q = out[:, H:2 * H]
    z_k = out[:, 2 * H:2 * H + 1]
    z_q = out[:, 2 * H + 1:2 * H + 2]
    rowsum_a = out[:, 2 * H + 2:2 * H + 3]          # out-degree incl. self loop

    # exact division (no approx reciprocal) for ranking fidelity
    x_rw_key = num_k / (z_k + 1e-16)                                         # [N, H]
    x_rw_qry = num_q / (z_q + 1e-16)                                         # [N, H]

    err_k = jnp.sum(jnp.abs(x_rw_key - x_t), axis=1, keepdims=True)          # [N, 1]
    diag_l1 = jnp.sum(jnp.abs(x_rw_qry - x_t), axis=1, keepdims=True)        # [N, 1]

    # ---- pairwise L1 (query) term: per-feature accumulation (no [N,N] accumulator
    # live across iterations, no A_nl / iota materialisation) -------------------------
    x_tT = jnp.transpose(x_t)                                                # [H, N] (XLU)
    q_acc = jnp.zeros((N, 1), f32)
    for d in range(H):   # static; H == C is small
        # TODO(synk): chunk with lax.fori_loop(..., unroll=k) for large H.
        row_d = x_tT[d:d + 1, :]                                             # [1, N]
        col_d = x_rw_qry[:, d:d + 1]                                         # [N, 1]
        q_acc = q_acc + jnp.sum(A * jnp.abs(col_d - row_d), axis=1, keepdims=True)
    # self-loop column contributes exactly diag_l1; original edges are loop-free
    q_weighted = q_acc - diag_l1                                             # [N, 1]
    deg_nl = rowsum_a - 1.0                                                  # loop-free out-degree

    score_sum = deg_nl * err_k - q_weighted                                  # [N, 1]

    # ---- GraphConv fitness = sigmoid(W_rel (A^T x) + W_root x + b) ------------------
    fitness = jax.nn.sigmoid(agg_rel + x_root + b_gc)                        # [N, 1]

    # ---- lane-dense store: one [N,2] -> [2,N] transpose, combine in row layout ------
    rhs_ref[:, 0:1] = fitness
    rhs_ref[:, 1:2] = score_sum
    fs = jnp.transpose(rhs_ref[:, 0:2])                                      # [2, N]
    o_ref[...] = (fs[0:1, :] - LAMB * fs[1:2, :]).astype(o_ref.dtype)


def pack_params(params):
    """Pack all RedConv weights/biases into a single [C+1, H+4] tensor (H == C)."""
    z11 = jnp.zeros((1, 1), jnp.float32)
    w_blk = jnp.concatenate(
        [params["w_gcn"], params["w_root"], params["w_rel"],
         params["w_key"], params["w_qry"]], axis=1)                  # [C, H+4]
    b_blk = jnp.concatenate(
        [params["b_gcn"], params["b_gc"], z11,
         params["b_key"], params["b_qry"]], axis=1)                  # [1, H+4]
    return jnp.concatenate([w_blk, b_blk], axis=0)                   # [C+1, H+4]


def red_conv_score_batched(x_b, a_b, packed_params):
    """x_b:[G,N,C] f32, a_b:[G,N,N] bf16 (with self loops) -> scores [G,1,N] f32."""
    G, N, C = x_b.shape
    P0, P1 = packed_params.shape
    return pl.pallas_call(
        _redconv_score_kernel,
        out_shape=jax.ShapeDtypeStruct((G, 1, N), jnp.float32),
        grid=(G,),
        in_specs=[
            pl.BlockSpec((None, N, C), lambda g: (g, 0, 0)),
            pl.BlockSpec((None, N, N), lambda g: (g, 0, 0)),
            pl.BlockSpec((P0, P1), lambda g: (0, 0)),        # params resident across grid
        ],
        out_specs=pl.BlockSpec((None, 1, N), lambda g: (g, 0, 0)),   # lane-dense rows
        scratch_shapes=[pltpu.VMEM((N, 2 * C + 3), jnp.float32)],
        compiler_params=pltpu.CompilerParams(
            dimension_semantics=("parallel",),               # graphs shard across TCs (v7x)
            vmem_limit_bytes=48 * 1024 * 1024),
    )(x_b, a_b, packed_params)


def dense_adj_with_self_loops(edge_index, n):
    """Dense 0/1 adjacency (bf16 is exact for 0/1) with a self loop on every node."""
    src, dst = edge_index[0], edge_index[1]
    a = jnp.zeros((n, n), jnp.bfloat16).at[src, dst].set(1.0)
    return jnp.maximum(a, jnp.eye(n, dtype=jnp.bfloat16))    # add_remaining_self_loops


def sagpool_forward(x, edge_index, params, ratio=RATIO):
    """Mirrors SAGPool.forward for a single graph (batch = zeros).

    Returns (x_pooled, filtered_edge_index, filtered_edge_attr(None), batch_pooled, perm).
    """
    N, C = x.shape
    src, dst = edge_index[0], edge_index[1]

    A = dense_adj_with_self_loops(edge_index, N)             # original edges assumed loop-free
    packed = pack_params(params)

    score = red_conv_score_batched(x[None], A[None], packed)[0, 0, :]   # [N] (Pallas hot path)

    # TODO(synk): top-k selection + filter_adj produce data-dependent shapes; kept as
    # host-side JAX glue rather than in-kernel.
    k = int(math.ceil(ratio * N))
    _, perm = lax.top_k(score, k)                            # descending, like PyG topk

    x_out = x[perm] * jnp.tanh(score[perm])[:, None]
    batch = jnp.zeros((N,), jnp.int32)
    batch_out = batch[perm]

    # filter_adj on the ORIGINAL edge_index
    node_map = jnp.full((N,), -1, jnp.int32).at[perm].set(jnp.arange(k, dtype=jnp.int32))
    new_row = node_map[src]
    new_col = node_map[dst]
    keep = (new_row >= 0) & (new_col >= 0)
    filt_edge_index = jnp.stack([new_row[keep], new_col[keep]])

    return x_out, filt_edge_index, None, batch_out, perm


def init_params(key, in_channels):
    C = in_channels
    H = C  # RedConv.hidden_channels = in_channels
    ks = jax.random.split(key, 8)
    f32 = jnp.float32
    return {
        # GCNConv(in_channels -> hidden): weight [C,H] (x @ W layout), bias [1,H]
        "w_gcn": 0.30 * jax.random.normal(ks[0], (C, H), f32),
        "b_gcn": 0.05 * jax.random.normal(ks[1], (1, H), f32),
        # key_linear / query_linear: Linear(H -> 1)
        "w_key": 0.30 * jax.random.normal(ks[2], (H, 1), f32),
        "b_key": 0.05 * jax.random.normal(ks[3], (1, 1), f32),
        "w_qry": 0.30 * jax.random.normal(ks[4], (H, 1), f32),
        "b_qry": 0.05 * jax.random.normal(ks[5], (1, 1), f32),
        # GraphConv(in_channels -> 1): lin_rel (with bias) + lin_root (no bias)
        "w_rel": 0.30 * jax.random.normal(ks[6], (C, 1), f32),
        "w_root": 0.30 * jax.random.normal(ks[7], (C, 1), f32),
        "b_gc": jnp.zeros((1, 1), f32),
        # NOTE: RedConv.att (Linear(2C,1)) is never used in forward -> omitted.
    }


def _reference_scores(x, A, params):
    """Plain-JAX dense re-implementation of RedConv.forward (per-source masked softmax)."""
    hi = jax.lax.Precision.HIGHEST
    N, C = x.shape
    deg = jnp.sum(A, axis=0)                                   # in-degree (with self loops)
    dinv = jnp.where(deg > 0, 1.0 / jnp.sqrt(deg), 0.0)[:, None]
    x_lin = jnp.dot(x, params["w_gcn"], precision=hi)
    x_t = dinv * jnp.dot(A.T, dinv * x_lin, precision=hi) + params["b_gcn"]

    def reweight(w, b):
        s = jnp.dot(x_t, w, precision=hi) + b                  # [N,1] target-node scores
        s = jnp.where(s >= 0, s, LEAKY_SLOPE * s)
        sm = jnp.where(A > 0, s[:, 0][None, :], -jnp.inf)      # rows = sources
        p = jax.nn.softmax(sm, axis=1)
        return jnp.dot(p, x_t, precision=hi)

    x_rw_k = reweight(params["w_key"], params["b_key"])
    x_rw_q = reweight(params["w_qry"], params["b_qry"])
    err_k = jnp.sum(jnp.abs(x_rw_k - x_t), axis=1)
    l1 = jnp.sum(jnp.abs(x_rw_q[:, None, :] - x_t[None, :, :]), axis=2)   # [N,N]
    a_nl = A * (1.0 - jnp.eye(N))
    score_sum = jnp.sum(a_nl, axis=1) * err_k - jnp.sum(a_nl * l1, axis=1)
    fitness = jax.nn.sigmoid(
        jnp.dot(A.T, jnp.dot(x, params["w_rel"], precision=hi), precision=hi)
        + jnp.dot(x, params["w_root"], precision=hi) + params["b_gc"])[:, 0]
    return fitness - LAMB * score_sum


if __name__ == "__main__":
    N, C = 16, 8   # 16 nodes, 8 feature channels

    key = jax.random.PRNGKey(0)
    k_x, k_p, k_x2 = jax.random.split(key, 3)
    x = jax.random.normal(k_x, (N, C), jnp.float32)
    params = init_params(k_p, C)

    # Directed ring (both directions) + a few chords, no self loops.
    fwd_src = list(range(N))
    fwd_dst = [(i + 1) % N for i in range(N)]
    bwd_src = [(i + 1) % N for i in range(N)]
    bwd_dst = list(range(N))
    chord_src = [0, 3, 5, 8]
    chord_dst = [7, 11, 2, 14]
    edge_index = jnp.stack([
        jnp.array(fwd_src + bwd_src + chord_src, jnp.int32),
        jnp.array(fwd_dst + bwd_dst + chord_dst, jnp.int32),
    ])

    # Full SAGPool forward (single graph, grid size 1).
    x_pool, eidx_pool, eattr_pool, batch_pool, perm = sagpool_forward(
        x, edge_index, params, ratio=RATIO)
    jax.block_until_ready((x_pool, eidx_pool, batch_pool, perm))
    assert x_pool.shape == (math.ceil(RATIO * N), C)

    # Numerical check of the Pallas scorer against a plain-JAX reference.
    A1 = dense_adj_with_self_loops(edge_index, N)
    packed = pack_params(params)
    got = red_conv_score_batched(x[None], A1[None], packed)[0, 0, :]
    ref = _reference_scores(x, A1.astype(jnp.float32), params)
    err = float(jnp.max(jnp.abs(got - ref)))
    assert err < 5e-2, f"scorer mismatch vs reference: {err}"

    # Also exercise the batched scorer (grid over 2 graphs, "parallel" axis).
    x2 = jax.random.normal(k_x2, (N, C), jnp.float32)
    scores_b = red_conv_score_batched(jnp.stack([x, x2]), jnp.stack([A1, A1]), packed)
    jax.block_until_ready(scores_b)
    assert scores_b.shape == (2, 1, N)
    assert bool(jnp.all(jnp.isfinite(scores_b)))

    print("KERNEL_OK")
</pallas_src>

<mosaic_0001>
module attributes {stable_mosaic.version = 11 : i64} {
  func.func @_redconv_score_kernel(%arg0: i32, %arg1: memref<1x16x8xf32, #tpu.memory_space<vmem>>, %arg2: memref<1x16x16xbf16, #tpu.memory_space<vmem>>, %arg3: memref<9x12xf32, #tpu.memory_space<vmem>>, %arg4: memref<1x1x16xf32, #tpu.memory_space<vmem>>, %arg5: memref<16x19xf32, #tpu.memory_space<vmem>>) attributes {dimension_semantics = [#tpu.dimension_semantics<parallel>], iteration_bounds = array<i64: 1>, scalar_prefetch = 0 : i64, scratch_operands = 1 : i64, tpu.core_type = #tpu.core_type<tc>, window_params = [{transform_indices = @transform_0, window_bounds = array<i64: 1, 16, 8>}, {transform_indices = @transform_1, window_bounds = array<i64: 1, 16, 16>}, {pipeline_mode = #tpu.pipeline_mode<synchronous>, transform_indices = @transform_2, window_bounds = array<i64: 9, 12>}, {transform_indices = @transform_3, window_bounds = array<i64: 1, 1, 16>}]} {
    %c0 = arith.constant 0 : index
    %c0_0 = arith.constant 0 : index
    %c0_1 = arith.constant 0 : index
    %0 = vector.load %arg1[%c0, %c0_0, %c0_1] : memref<1x16x8xf32, #tpu.memory_space<vmem>>, vector<1x16x8xf32>
    %1 = vector.shape_cast %0 : vector<1x16x8xf32> to vector<16x8xf32>
    %c0_2 = arith.constant 0 : index
    %c0_3 = arith.constant 0 : index
    %c0_4 = arith.constant 0 : index
    %2 = vector.load %arg2[%c0_2, %c0_3, %c0_4] : memref<1x16x16xbf16, #tpu.memory_space<vmem>>, vector<1x16x16xbf16>
    %3 = vector.shape_cast %2 : vector<1x16x16xbf16> to vector<16x16xbf16>
    %4 = arith.extf %3 : vector<16x16xbf16> to vector<16x16xf32>
    %c0_5 = arith.constant 0 : index
    %c0_6 = arith.constant 0 : index
    %5 = vector.load %arg3[%c0_5, %c0_6] : memref<9x12xf32, #tpu.memory_space<vmem>>, vector<9x12xf32>
    %6 = vector.extract_strided_slice %5 {offsets = [0, 0], sizes = [8, 10], strides = [1, 1]} : vector<9x12xf32> to vector<8x10xf32>
    %7 = vector.extract_strided_slice %5 {offsets = [0, 10], sizes = [8, 2], strides = [1, 1]} : vector<9x12xf32> to vector<8x2xf32>
    %8 = vector.extract_strided_slice %5 {offsets = [8, 0], sizes = [1, 8], strides = [1, 1]} : vector<9x12xf32> to vector<1x8xf32>
    %9 = vector.extract_strided_slice %5 {offsets = [8, 8], sizes = [1, 1], strides = [1, 1]} : vector<9x12xf32> to vector<1x1xf32>
    %10 = vector.extract_strided_slice %5 {offsets = [8, 10], sizes = [1, 2], strides = [1, 1]} : vector<9x12xf32> to vector<1x2xf32>
    %cst = arith.constant 1.000000e+00 : f32
    %11 = vector.broadcast %cst : f32 to vector<16x1xf32>
    %cst_7 = arith.constant dense<0.000000e+00> : vector<16x10xf32>
    %12 = tpu.matmul %1, %6, %cst_7 {dimension_numbers = #tpu.dot_dimension_numbers<[1], [0], [0], [1], [0, 0, 1, 1], [], []>} : vector<16x8xf32>, vector<8x10xf32>, vector<16x10xf32> -> vector<16x10xf32>
    %13 = vector.extract_strided_slice %12 {offsets = [0, 8], sizes = [16, 1], strides = [1, 1]} : vector<16x10xf32> to vector<16x1xf32>
    %cst_8 = arith.constant dense<0.000000e+00> : vector<16x1xf32>
    %14 = tpu.matmul %4, %11, %cst_8 {dimension_numbers = #tpu.dot_dimension_numbers<[0], [0], [1], [1], [0, 1, 1, 1], [], []>} : vector<16x16xf32>, vector<16x1xf32>, vector<16x1xf32> -> vector<16x1xf32>
    %cst_9 = arith.constant 0.000000e+00 : f32
    %15 = vector.broadcast %cst_9 : f32 to vector<16x1xf32>
    %16 = arith.cmpf ogt, %14, %15 : vector<16x1xf32>
    %17 = math.rsqrt %14 : vector<16x1xf32>
    %cst_10 = arith.constant 0.000000e+00 : f32
    %18 = vector.broadcast %cst_10 : f32 to vector<16x1xf32>
    %19 = arith.select %16, %17, %18 : vector<16x1xi1>, vector<16x1xf32>
    %20 = tpu.iota {dimensions = array<i32: 1>} : vector<1x10xi32>
    %c8_i32 = arith.constant 8 : i32
    %21 = vector.broadcast %c8_i32 : i32 to vector<1x10xi32>
    %22 = arith.cmpi slt, %20, %21 : vector<1x10xi32>
    %cst_11 = arith.constant 1.000000e+00 : f32
    %23 = vector.shape_cast %22 : vector<1x10xi1> to vector<1x10xi1>
    %24 = vector.broadcast %23 : vector<1x10xi1> to vector<16x10xi1>
    %25 = vector.shape_cast %19 : vector<16x1xf32> to vector<16x1xf32>
    %26 = vector.broadcast %25 : vector<16x1xf32> to vector<16x10xf32>
    %27 = vector.broadcast %cst_11 : f32 to vector<16x10xf32>
    %28 = arith.select %24, %26, %27 : vector<16x10xi1>, vector<16x10xf32>
    %29 = arith.mulf %12, %28 : vector<16x10xf32>
    %cst_12 = arith.constant dense<0.000000e+00> : vector<16x10xf32>
    %30 = tpu.matmul %4, %29, %cst_12 {dimension_numbers = #tpu.dot_dimension_numbers<[0], [0], [1], [1], [0, 1, 1, 1], [], []>} : vector<16x16xf32>, vector<16x10xf32>, vector<16x10xf32> -> vector<16x10xf32>
    %31 = vector.extract_strided_slice %30 {offsets = [0, 0], sizes = [16, 8], strides = [1, 1]} : vector<16x10xf32> to vector<16x8xf32>
    %32 = vector.broadcast %19 : vector<16x1xf32> to vector<16x8xf32>
    %33 = arith.mulf %32, %31 : vector<16x8xf32>
    %34 = vector.broadcast %8 : vector<1x8xf32> to vector<16x8xf32>
    %35 = arith.addf %33, %34 : vector<16x8xf32>
    %36 = vector.extract_strided_slice %30 {offsets = [0, 9], sizes = [16, 1], strides = [1, 1]} : vector<16x10xf32> to vector<16x1xf32>
    %cst_13 = arith.constant dense<0.000000e+00> : vector<16x2xf32>
    %37 = tpu.matmul %35, %7, %cst_13 {dimension_numbers = #tpu.dot_dimension_numbers<[1], [0], [0], [1], [0, 0, 1, 1], [], []>} : vector<16x8xf32>, vector<8x2xf32>, vector<16x2xf32> -> vector<16x2xf32>
    %38 = vector.broadcast %10 : vector<1x2xf32> to vector<16x2xf32>
    %39 = arith.addf %37, %38 : vector<16x2xf32>
    %cst_14 = arith.constant 0.000000e+00 : f32
    %40 = vector.broadcast %cst_14 : f32 to vector<16x2xf32>
    %41 = arith.cmpf oge, %39, %40 : vector<16x2xf32>
    %cst_15 = arith.constant 0.00999999977 : f32
    %42 = vector.broadcast %cst_15 : f32 to vector<16x2xf32>
    %43 = arith.mulf %42, %39 : vector<16x2xf32>
    %44 = arith.select %41, %39, %43 : vector<16x2xi1>, vector<16x2xf32>
    %cst_16 = arith.constant dense<0xFF800000> : vector<2xf32>
    %45 = vector.multi_reduction <maximumf>, %44, %cst_16 [0] : vector<16x2xf32> to vector<2xf32>
    %46 = vector.shape_cast %45 : vector<2xf32> to vector<1x2xf32>
    %47 = vector.broadcast %46 : vector<1x2xf32> to vector<16x2xf32>
    %48 = arith.subf %44, %47 : vector<16x2xf32>
    %49 = math.exp %48 : vector<16x2xf32>
    %50 = vector.extract_strided_slice %49 {offsets = [0, 0], sizes = [16, 1], strides = [1, 1]} : vector<16x2xf32> to vector<16x1xf32>
    %51 = vector.extract_strided_slice %49 {offsets = [0, 1], sizes = [16, 1], strides = [1, 1]} : vector<16x2xf32> to vector<16x1xf32>
    %52 = vector.broadcast %50 : vector<16x1xf32> to vector<16x8xf32>
    %53 = arith.mulf %35, %52 : vector<16x8xf32>
    %c0_17 = arith.constant 0 : index
    %c0_18 = arith.constant 0 : index
    %54 = vector.load %arg5[%c0_17, %c0_18] : memref<16x19xf32, #tpu.memory_space<vmem>>, vector<16x8xf32>
    tpu.vector_store %arg5[%c0_17, %c0_18], %53 {strides = array<i32>} : memref<16x19xf32, #tpu.memory_space<vmem>>, vector<16x8xf32>,
    %55 = vector.broadcast %51 : vector<16x1xf32> to vector<16x8xf32>
    %56 = arith.mulf %35, %55 : vector<16x8xf32>
    %c0_19 = arith.constant 0 : index
    %c8 = arith.constant 8 : index
    %57 = vector.load %arg5[%c0_19, %c8] : memref<16x19xf32, #tpu.memory_space<vmem>>, vector<16x8xf32>
    tpu.vector_store %arg5[%c0_19, %c8], %56 {strides = array<i32>} : memref<16x19xf32, #tpu.memory_space<vmem>>, vector<16x8xf32>,
    %c0_20 = arith.constant 0 : index
    %c16 = arith.constant 16 : index
    %58 = vector.load %arg5[%c0_20, %c16] : memref<16x19xf32, #tpu.memory_space<vmem>>, vector<16x2xf32>
    tpu.vector_store %arg5[%c0_20, %c16], %49 {strides = array<i32>} : memref<16x19xf32, #tpu.memory_space<vmem>>, vector<16x2xf32>,
    %c0_21 = arith.constant 0 : index
    %c18 = arith.constant 18 : index
    %59 = vector.load %arg5[%c0_21, %c18] : memref<16x19xf32, #tpu.memory_space<vmem>>, vector<16x1xf32>
    tpu.vector_store %arg5[%c0_21, %c18], %11 {strides = array<i32>} : memref<16x19xf32, #tpu.memory_space<vmem>>, vector<16x1xf32>,
    %c0_22 = arith.constant 0 : index
    %c0_23 = arith.constant 0 : index
    %60 = vector.load %arg5[%c0_22, %c0_23] : memref<16x19xf32, #tpu.memory_space<vmem>>, vector<16x19xf32>
    %cst_24 = arith.constant dense<0.000000e+00> : vector<16x19xf32>
    %61 = tpu.matmul %4, %60, %cst_24 {dimension_numbers = #tpu.dot_dimension_numbers<[1], [0], [0], [1], [0, 0, 1, 1], [], []>} : vector<16x16xf32>, vector<16x19xf32>, vector<16x19xf32> -> vector<16x19xf32>
    %62 = vector.extract_strided_slice %61 {offsets = [0, 0], sizes = [16, 8], strides = [1, 1]} : vector<16x19xf32> to vector<16x8xf32>
    %63 = vector.extract_strided_slice %61 {offsets = [0, 8], sizes = [16, 8], strides = [1, 1]} : vector<16x19xf32> to vector<16x8xf32>
    %64 = vector.extract_strided_slice %61 {offsets = [0, 16], sizes = [16, 1], strides = [1, 1]} : vector<16x19xf32> to vector<16x1xf32>
    %65 = vector.extract_strided_slice %61 {offsets = [0, 17], sizes = [16, 1], strides = [1, 1]} : vector<16x19xf32> to vector<16x1xf32>
    %66 = vector.extract_strided_slice %61 {offsets = [0, 18], sizes = [16, 1], strides = [1, 1]} : vector<16x19xf32> to vector<16x1xf32>
    %cst_25 = arith.constant 1.000000e-16 : f32
    %67 = vector.broadcast %cst_25 : f32 to vector<16x1xf32>
    %68 = arith.addf %64, %67 : vector<16x1xf32>
    %69 = vector.broadcast %68 : vector<16x1xf32> to vector<16x8xf32>
    %70 = arith.divf %62, %69 : vector<16x8xf32>
    %cst_26 = arith.constant 1.000000e-16 : f32
    %71 = vector.broadcast %cst_26 : f32 to vector<16x1xf32>
    %72 = arith.addf %65, %71 : vector<16x1xf32>
    %73 = vector.broadcast %72 : vector<16x1xf32> to vector<16x8xf32>
    %74 = arith.divf %63, %73 : vector<16x8xf32>
    %75 = arith.subf %70, %35 : vector<16x8xf32>
    %76 = math.absf %75 : vector<16x8xf32>
    %cst_27 = arith.constant dense<0.000000e+00> : vector<16xf32>
    %77 = vector.multi_reduction <add>, %76, %cst_27 [1] : vector<16x8xf32> to vector<16xf32>
    %78 = vector.shape_cast %77 : vector<16xf32> to vector<16x1xf32>
    %79 = arith.subf %74, %35 : vector<16x8xf32>
    %80 = math.absf %79 : vector<16x8xf32>
    %cst_28 = arith.constant dense<0.000000e+00> : vector<16xf32>
    %81 = vector.multi_reduction <add>, %80, %cst_28 [1] : vector<16x8xf32> to vector<16xf32>
    %82 = vector.shape_cast %81 : vector<16xf32> to vector<16x1xf32>
    %83 = tpu.transpose %35, [1, 0] : vector<16x8xf32> -> vector<8x16xf32>
    %cst_29 = arith.constant 0.000000e+00 : f32
    %84 = vector.broadcast %cst_29 : f32 to vector<16x1xf32>
    %85 = vector.extract_strided_slice %83 {offsets = [0, 0], sizes = [1, 16], strides = [1, 1]} : vector<8x16xf32> to vector<1x16xf32>
    %86 = vector.extract_strided_slice %74 {offsets = [0, 0], sizes = [16, 1], strides = [1, 1]} : vector<16x8xf32> to vector<16x1xf32>
    %87 = vector.broadcast %86 : vector<16x1xf32> to vector<16x16xf32>
    %88 = vector.broadcast %85 : vector<1x16xf32> to vector<16x16xf32>
    %89 = arith.subf %87, %88 : vector<16x16xf32>
    %90 = math.absf %89 : vector<16x16xf32>
    %91 = arith.mulf %4, %90 : vector<16x16xf32>
    %cst_30 = arith.constant dense<0.000000e+00> : vector<16xf32>
    %92 = vector.multi_reduction <add>, %91, %cst_30 [1] : vector<16x16xf32> to vector<16xf32>
    %93 = vector.shape_cast %92 : vector<16xf32> to vector<16x1xf32>
    %94 = arith.addf %84, %93 : vector<16x1xf32>
    %95 = vector.extract_strided_slice %83 {offsets = [1, 0], sizes = [1, 16], strides = [1, 1]} : vector<8x16xf32> to vector<1x16xf32>
    %96 = vector.extract_strided_slice %74 {offsets = [0, 1], sizes = [16, 1], strides = [1, 1]} : vector<16x8xf32> to vector<16x1xf32>
    %97 = vector.broadcast %96 : vector<16x1xf32> to vector<16x16xf32>
    %98 = vector.broadcast %95 : vector<1x16xf32> to vector<16x16xf32>
    %99 = arith.subf %97, %98 : vector<16x16xf32>
    %100 = math.absf %99 : vector<16x16xf32>
    %101 = arith.mulf %4, %100 : vector<16x16xf32>
    %cst_31 = arith.constant dense<0.000000e+00> : vector<16xf32>
    %102 = vector.multi_reduction <add>, %101, %cst_31 [1] : vector<16x16xf32> to vector<16xf32>
    %103 = vector.shape_cast %102 : vector<16xf32> to vector<16x1xf32>
    %104 = arith.addf %94, %103 : vector<16x1xf32>
    %105 = vector.extract_strided_slice %83 {offsets = [2, 0], sizes = [1, 16], strides = [1, 1]} : vector<8x16xf32> to vector<1x16xf32>
    %106 = vector.extract_strided_slice %74 {offsets = [0, 2], sizes = [16, 1], strides = [1, 1]} : vector<16x8xf32> to vector<16x1xf32>
    %107 = vector.broadcast %106 : vector<16x1xf32> to vector<16x16xf32>
    %108 = vector.broadcast %105 : vector<1x16xf32> to vector<16x16xf32>
    %109 = arith.subf %107, %108 : vector<16x16xf32>
    %110 = math.absf %109 : vector<16x16xf32>
    %111 = arith.mulf %4, %110 : vector<16x16xf32>
    %cst_32 = arith.constant dense<0.000000e+00> : vector<16xf32>
    %112 = vector.multi_reduction <add>, %111, %cst_32 [1] : vector<16x16xf32> to vector<16xf32>
    %113 = vector.shape_cast %112 : vector<16xf32> to vector<16x1xf32>
    %114 = arith.addf %104, %113 : vector<16x1xf32>
    %115 = vector.extract_strided_slice %83 {offsets = [3, 0], sizes = [1, 16], strides = [1, 1]} : vector<8x16xf32> to vector<1x16xf32>
    %116 = vector.extract_strided_slice %74 {offsets = [0, 3], sizes = [16, 1], strides = [1, 1]} : vector<16x8xf32> to vector<16x1xf32>
    %117 = vector.broadcast %116 : vector<16x1xf32> to vector<16x16xf32>
    %118 = vector.broadcast %115 : vector<1x16xf32> to vector<16x16xf32>
    %119 = arith.subf %117, %118 : vector<16x16xf32>
    %120 = math.absf %119 : vector<16x16xf32>
    %121 = arith.mulf %4, %120 : vector<16x16xf32>
    %cst_33 = arith.constant dense<0.000000e+00> : vector<16xf32>
    %122 = vector.multi_reduction <add>, %121, %cst_33 [1] : vector<16x16xf32> to vector<16xf32>
    %123 = vector.shape_cast %122 : vector<16xf32> to vector<16x1xf32>
    %124 = arith.addf %114, %123 : vector<16x1xf32>
    %125 = vector.extract_strided_slice %83 {offsets = [4, 0], sizes = [1, 16], strides = [1, 1]} : vector<8x16xf32> to vector<1x16xf32>
    %126 = vector.extract_strided_slice %74 {offsets = [0, 4], sizes = [16, 1], strides = [1, 1]} : vector<16x8xf32> to vector<16x1xf32>
    %127 = vector.broadcast %126 : vector<16x1xf32> to vector<16x16xf32>
    %128 = vector.broadcast %125 : vector<1x16xf32> to vector<16x16xf32>
    %129 = arith.subf %127, %128 : vector<16x16xf32>
    %130 = math.absf %129 : vector<16x16xf32>
    %131 = arith.mulf %4, %130 : vector<16x16xf32>
    %cst_34 = arith.constant dense<0.000000e+00> : vector<16xf32>
    %132 = vector.multi_reduction <add>, %131, %cst_34 [1] : vector<16x16xf32> to vector<16xf32>
    %133 = vector.shape_cast %132 : vector<16xf32> to vector<16x1xf32>
    %134 = arith.addf %124, %133 : vector<16x1xf32>
    %135 = vector.extract_strided_slice %83 {offsets = [5, 0], sizes = [1, 16], strides = [1, 1]} : vector<8x16xf32> to vector<1x16xf32>
    %136 = vector.extract_strided_slice %74 {offsets = [0, 5], sizes = [16, 1], strides = [1, 1]} : vector<16x8xf32> to vector<16x1xf32>
    %137 = vector.broadcast %136 : vector<16x1xf32> to vector<16x16xf32>
    %138 = vector.broadcast %135 : vector<1x16xf32> to vector<16x16xf32>
    %139 = arith.subf %137, %138 : vector<16x16xf32>
    %140 = math.absf %139 : vector<16x16xf32>
    %141 = arith.mulf %4, %140 : vector<16x16xf32>
    %cst_35 = arith.constant dense<0.000000e+00> : vector<16xf32>
    %142 = vector.multi_reduction <add>, %141, %cst_35 [1] : vector<16x16xf32> to vector<16xf32>
    %143 = vector.shape_cast %142 : vector<16xf32> to vector<16x1xf32>
    %144 = arith.addf %134, %143 : vector<16x1xf32>
    %145 = vector.extract_strided_slice %83 {offsets = [6, 0], sizes = [1, 16], strides = [1, 1]} : vector<8x16xf32> to vector<1x16xf32>
    %146 = vector.extract_strided_slice %74 {offsets = [0, 6], sizes = [16, 1], strides = [1, 1]} : vector<16x8xf32> to vector<16x1xf32>
    %147 = vector.broadcast %146 : vector<16x1xf32> to vector<16x16xf32>
    %148 = vector.broadcast %145 : vector<1x16xf32> to vector<16x16xf32>
    %149 = arith.subf %147, %148 : vector<16x16xf32>
    %150 = math.absf %149 : vector<16x16xf32>
    %151 = arith.mulf %4, %150 : vector<16x16xf32>
    %cst_36 = arith.constant dense<0.000000e+00> : vector<16xf32>
    %152 = vector.multi_reduction <add>, %151, %cst_36 [1] : vector<16x16xf32> to vector<16xf32>
    %153 = vector.shape_cast %152 : vector<16xf32> to vector<16x1xf32>
    %154 = arith.addf %144, %153 : vector<16x1xf32>
    %155 = vector.extract_strided_slice %83 {offsets = [7, 0], sizes = [1, 16], strides = [1, 1]} : vector<8x16xf32> to vector<1x16xf32>
    %156 = vector.extract_strided_slice %74 {offsets = [0, 7], sizes = [16, 1], strides = [1, 1]} : vector<16x8xf32> to vector<16x1xf32>
    %157 = vector.broadcast %156 : vector<16x1xf32> to vector<16x16xf32>
    %158 = vector.broadcast %155 : vector<1x16xf32> to vector<16x16xf32>
    %159 = arith.subf %157, %158 : vector<16x16xf32>
    %160 = math.absf %159 : vector<16x16xf32>
    %161 = arith.mulf %4, %160 : vector<16x16xf32>
    %cst_37 = arith.constant dense<0.000000e+00> : vector<16xf32>
    %162 = vector.multi_reduction <add>, %161, %cst_37 [1] : vector<16x16xf32> to vector<16xf32>
    %163 = vector.shape_cast %162 : vector<16xf32> to vector<16x1xf32>
    %164 = arith.addf %154, %163 : vector<16x1xf32>
    %165 = arith.subf %164, %82 : vector<16x1xf32>
    %cst_38 = arith.constant 1.000000e+00 : f32
    %166 = vector.broadcast %cst_38 : f32 to vector<16x1xf32>
    %167 = arith.subf %66, %166 : vector<16x1xf32>
    %168 = arith.mulf %167, %78 : vector<16x1xf32>
    %169 = arith.subf %168, %165 : vector<16x1xf32>
    %170 = arith.addf %36, %13 : vector<16x1xf32>
    %171 = vector.broadcast %9 : vector<1x1xf32> to vector<16x1xf32>
    %172 = arith.addf %170, %171 : vector<16x1xf32>
    %173 = arith.negf %172 : vector<16x1xf32>
    %174 = math.exp %173 : vector<16x1xf32>
    %cst_39 = arith.constant 1.000000e+00 : f32
    %175 = vector.broadcast %cst_39 : f32 to vector<16x1xf32>
    %176 = arith.addf %175, %174 : vector<16x1xf32>
    %177 = arith.divf %175, %176 : vector<16x1xf32>
    %c0_40 = arith.constant 0 : index
    %c0_41 = arith.constant 0 : index
    %178 = vector.load %arg5[%c0_40, %c0_41] : memref<16x19xf32, #tpu.memory_space<vmem>>, vector<16x1xf32>
    tpu.vector_store %arg5[%c0_40, %c0_41], %177 {strides = array<i32>} : memref<16x19xf32, #tpu.memory_space<vmem>>, vector<16x1xf32>,
    %c0_42 = arith.constant 0 : index
    %c1 = arith.constant 1 : index
    %179 = vector.load %arg5[%c0_42, %c1] : memref<16x19xf32, #tpu.memory_space<vmem>>, vector<16x1xf32>
    tpu.vector_store %arg5[%c0_42, %c1], %169 {strides = array<i32>} : memref<16x19xf32, #tpu.memory_space<vmem>>, vector<16x1xf32>,
    %c0_43 = arith.constant 0 : index
    %c0_44 = arith.constant 0 : index
    %180 = vector.load %arg5[%c0_43, %c0_44] : memref<16x19xf32, #tpu.memory_space<vmem>>, vector<16x2xf32>
    %181 = tpu.transpose %180, [1, 0] : vector<16x2xf32> -> vector<2x16xf32>
    %182 = vector.extract_strided_slice %181 {offsets = [0, 0], sizes = [1, 16], strides = [1, 1]} : vector<2x16xf32> to vector<1x16xf32>
    %183 = vector.extract_strided_slice %181 {offsets = [1, 0], sizes = [1, 16], strides = [1, 1]} : vector<2x16xf32> to vector<1x16xf32>
    %cst_45 = arith.constant 1.000000e-01 : f32
    %184 = vector.broadcast %cst_45 : f32 to vector<1x16xf32>
    %185 = arith.mulf %184, %183 : vector<1x16xf32>
    %186 = arith.subf %182, %185 : vector<1x16xf32>
    %c0_46 = arith.constant 0 : index
    %c0_47 = arith.constant 0 : index
    %c0_48 = arith.constant 0 : index
    %187 = vector.load %arg4[%c0_46, %c0_47, %c0_48] : memref<1x1x16xf32, #tpu.memory_space<vmem>>, vector<1x1x16xf32>
    %188 = vector.shape_cast %187 : vector<1x1x16xf32> to vector<1x16xf32>
    %189 = vector.shape_cast %186 : vector<1x16xf32> to vector<1x1x16xf32>
    tpu.vector_store %arg4[%c0_46, %c0_47, %c0_48], %189 {strides = array<i32>} : memref<1x1x16xf32, #tpu.memory_space<vmem>>, vector<1x1x16xf32>,
    return
  }
  func.func @transform_0(%arg0: i32) -> (i32, i32, i32) {
    %c0_i32 = arith.constant 0 : i32
    %c0_i32_0 = arith.constant 0 : i32
    %c0_i32_1 = arith.constant 0 : i32
    return %arg0, %c0_i32, %c0_i32_0 : i32, i32, i32
  }
  func.func @transform_1(%arg0: i32) -> (i32, i32, i32) {
    %c0_i32 = arith.constant 0 : i32
    %c0_i32_0 = arith.constant 0 : i32
    %c0_i32_1 = arith.constant 0 : i32
    return %arg0, %c0_i32, %c0_i32_0 : i32, i32, i32
  }
  func.func @transform_2(%arg0: i32) -> (i32, i32) {
    %c0_i32 = arith.constant 0 : i32
    %c0_i32_0 = arith.constant 0 : i32
    %c0_i32_1 = arith.constant 0 : i32
    return %c0_i32, %c0_i32_0 : i32, i32
  }
  func.func @transform_3(%arg0: i32) -> (i32, i32, i32) {
    %c0_i32 = arith.constant 0 : i32
    %c0_i32_0 = arith.constant 0 : i32
    %c0_i32_1 = arith.constant 0 : i32
    return %arg0, %c0_i32, %c0_i32_0 : i32, i32, i32
  }
}

</mosaic_0001>

<llo_original>
// kernel: tpu_custom_call.1
$region0: #{tpu_custom_call.1}
  #allocation0 [shape = 'u32[]', space=smem, size = 0x4, offset = 0x4, fixed_abs, tag = 'smem constant byte address 0x4 - core index']
  #allocation1 [shape = 'u32[144,128]{1,0:T(1,128)}', space=vmem, size = 0x12000, scoped, tag = 'internal scratch']
  #allocation2 [shape = 'f32[16,19]{1,0:T(8,128)}', space=vmem, size = 0x2000, scoped, tag = 'scratch operand']
  %s0 = inlined_call_operand.vmem [shape: f32[1,16,8], index: 0, kind: input, shape index: {}]
  %s1 = inlined_call_operand.vmem [shape: bf16[1,16,16], index: 1, kind: input, shape index: {}]
  %s2 = inlined_call_operand.vmem [shape: f32[9,12], index: 2, kind: input, shape index: {}]
  %s3 = inlined_call_operand.hbm [shape: f32[1,1,16], index: 3, kind: output, shape index: {}]
  %s4 = sld [smem:[#allocation0]]
  $region22: #{tpu_custom_call.1} parent=0
    _
  %s6 = ssub.s32 1, %s4
  %s7 = scalar_select 0, %s6, %s4
  $region1: #{tpu_custom_call.1} parent=0
    #allocation3 [shape = 'u8[512]{0}', space=vmem, size = 0x400, scoped, tag = 'output window, operand 0, single buffered']
    #allocation4 [shape = 's32[1]{0}', space=sflag, size = 0x4, scoped, tag = 'scoped memory for tpu_custom_call.1']
    %8 = vsyncpa [#allocation4], 0
    // Predicated region
    $region2: #{tpu_custom_call.1} parent=1 // pred_check
      _
    $region3: #{tpu_custom_call.1} parent=1 // pred_check_branch
      %10 = sbr.rel (0) target = $region5
    $region4: #{tpu_custom_call.1} parent=1 // pred_region
      _
    $region5: #{tpu_custom_call.1} parent=1 // pred_fallthru
      _
    // Predicated region
    $region6: #{tpu_custom_call.1} parent=1 // pred_check
      _
    $region7: #{tpu_custom_call.1} parent=1 // pred_check_branch
      %12 = sbr.rel (0) target = $region9
    $region8: #{tpu_custom_call.1} parent=1 // pred_region
      _
    $region9: #{tpu_custom_call.1} parent=1 // pred_fallthru
      _
    // Predicated region
    $region10: #{tpu_custom_call.1} parent=1 // pred_check
      _
    $region11: #{tpu_custom_call.1} parent=1 // pred_check_branch
      %14 = sbr.rel (0) target = $region13
    $region12: #{tpu_custom_call.1} parent=1 // pred_region
      _
    $region13: #{tpu_custom_call.1} parent=1 // pred_fallthru
      _
    %v15 = vld [vmem:[%s0] sm:$0xff]
    %v16 = vld [vmem:[%s0 + $0x8] sm:$0xff]
    %v17 = vld [vmem:[%s1] sm:$0xf]
    %v18 = vld [vmem:[%s1 + $0x4] sm:$0xf]
    %v19 = vunpack.c.l.bf16 %v17
    %v20 = vunpack.c.l.bf16 %v18
    %v21 = vld [vmem:[%s2] sm:$0xff]
    %v22 = vld [vmem:[%s2 + $0x8] sm:$0x1]
    %vm23 = vcmask 64512
    %v25 = vsel %vm23, %v15, 0
    %v28 = vsel %vm23, %v16, 0
    %30 = vmatprep.subr.mxu0 0.0
    %31 = vmatpush1.msra.mxu0 %v21
    %32 = vmatprep.subr.mxu0 0.0
    %33 = vmatpush1.msra.mxu0 0.0
    %34 = vmatprep.subr.mxu0 0.0
    %35 = vmatpush1.msra.mxu0 0.0
    %36 = vmatprep.subr.mxu0 0.0
    %37 = vmatpush1.msra.mxu0 0.0
    %38 = vmatprep.subr.mxu0 0.0
    %39 = vmatpush1.msra.mxu0 0.0
    %40 = vmatprep.subr.mxu0 0.0
    %41 = vmatpush1.msra.mxu0 0.0
    %42 = vmatprep.subr.mxu0 0.0
    %43 = vmatpush1.msra.mxu0 0.0
    %44 = vmatprep.subr.mxu0 0.0
    %45 = vmatpush1.msra.mxu0 0.0
    %46 = vmatprep.subr.mxu0 0.0
    %47 = vmatpush1.msra.mxu0 0.0
    %48 = vmatprep.subr.mxu0 0.0
    %49 = vmatpush1.msra.mxu0 0.0
    %50 = vmatprep.subr.mxu0 0.0
    %51 = vmatpush1.msra.mxu0 0.0
    %52 = vmatprep.subr.mxu0 0.0
    %53 = vmatpush1.msra.mxu0 0.0
    %54 = vmatprep.subr.mxu0 0.0
    %55 = vmatpush1.msra.mxu0 0.0
    %56 = vmatprep.subr.mxu0 0.0
    %57 = vmatpush1.msra.mxu0 0.0
    %58 = vmatprep.subr.mxu0 0.0
    %59 = vmatpush1.msra.mxu0 0.0
    %60 = vmatprep.subr.mxu0 0.0
    %61 = vmatpush1.msra.mxu0 0.0
    %62 = vmatprep.subr.mxu0 0.0
    %63 = vmatpush1.msra.mxu0 0.0
    %64 = vmatprep.subr.mxu0 0.0
    %65 = vmatpush1.msra.mxu0 0.0
    %66 = vmatprep.subr.mxu0 0.0
    %67 = vmatpush1.msra.mxu0 0.0
    %68 = vmatprep.subr.mxu0 0.0
    %69 = vmatpush1.msra.mxu0 0.0
    %70 = vmatprep.subr.mxu0 0.0
    %71 = vmatpush1.msra.mxu0 0.0
    %72 = vmatprep.subr.mxu0 0.0
    %73 = vmatpush1.msra.mxu0 0.0
    %74 = vmatprep.subr.mxu0 0.0
    %75 = vmatpush1.msra.mxu0 0.0
    %76 = vmatprep.subr.mxu0 0.0
    %77 = vmatpush1.msra.mxu0 0.0
    %78 = vmatprep.subr.mxu0 0.0
    %79 = vmatpush1.msra.mxu0 0.0
    %80 = vmatprep.subr.mxu0 0.0
    %81 = vmatpush1.msra.mxu0 0.0
    %82 = vmatprep.subr.mxu0 0.0
    %83 = vmatpush1.msra.mxu0 0.0
    %84 = vmatprep.subr.mxu0 0.0
    %85 = vmatpush1.msra.mxu0 0.0
    %86 = vmatprep.subr.mxu0 0.0
    %87 = vmatpush1.msra.mxu0 0.0
    %88 = vmatprep.subr.mxu0 0.0
    %89 = vmatpush1.msra.mxu0 0.0
    %90 = vmatprep.subr.mxu0 0.0
    %91 = vmatpush1.msra.mxu0 0.0
    %92 = vmatprep.subr.mxu0 0.0
    %93 = vmatpush1.msra.mxu0 0.0
    %94 = vmatprep.mubr.f32.mxu0 0.0
    %95 = vmatmul.mubr.f32.gmra.mrb[0].mxu0 %v25
    %v96 = vpop.f32.mrb[0].mxu0
    %v97 = vadd.f32 0.0, %v96
    %v98 = vpop.f32.mrb[0].mxu0
    %99 = vmatprep.mubr.f32.mxu0 0.0
    %100 = vmatmul.mubr.f32.gmra.mrb[0].mxu0 %v28
    %v101 = vpop.f32.mrb[0].mxu0
    %v102 = vadd.f32 0.0, %v101
    %v103 = vpop.f32.mrb[0].mxu0
    %104 = vdwg.mxu0
    %105 = vxpose.xlu0.b32.start [1/16] %v19, 128
    %106 = vxpose.xlu0.b32.cont [2/16] %v20, 128
    %107 = vxpose.xlu0.b32.cont [3/16] 0.0, 128
    %108 = vxpose.xlu0.b32.cont [4/16] 0.0, 128
    %109 = vxpose.xlu0.b32.cont [5/16] 0.0, 128
    %110 = vxpose.xlu0.b32.cont [6/16] 0.0, 128
    %111 = vxpose.xlu0.b32.cont [7/16] 0.0, 128
    %112 = vxpose.xlu0.b32.cont [8/16] 0.0, 128
    %113 = vxpose.xlu0.b32.cont [9/16] 0.0, 128
    %114 = vxpose.xlu0.b32.cont [10/16] 0.0, 128
    %115 = vxpose.xlu0.b32.cont [11/16] 0.0, 128
    %116 = vxpose.xlu0.b32.cont [12/16] 0.0, 128
    %117 = vxpose.xlu0.b32.cont [13/16] 0.0, 128
    %118 = vxpose.xlu0.b32.cont [14/16] 0.0, 128
    %119 = vxpose.xlu0.b32.cont [15/16] 0.0, 128
    %120 = vxpose.xlu0.b32.end [16/16] 0.0, 128
    %v121 = vpop.trf.xlu0
    %v122 = vpop.trf.xlu0
    %v123 = vpop.trf.xlu0
    %v124 = vpop.trf.xlu0
    %v125 = vpop.trf.xlu0
    %v126 = vpop.trf.xlu0
    %v127 = vpop.trf.xlu0
    %v128 = vpop.trf.xlu0
    %v129 = vpop.trf.xlu0
    %v130 = vpop.trf.xlu0
    %v131 = vpop.trf.xlu0
    %v132 = vpop.trf.xlu0
    %v133 = vpop.trf.xlu0
    %v134 = vpop.trf.xlu0
    %v135 = vpop.trf.xlu0
    %v136 = vpop.trf.xlu0
    %vm137 = vcmask 130048
    %v139 = vsel %vm137, %v121, 0
    %v142 = vsel %vm137, %v122, 0
    %144 = vmatprep.subr.mxu0 0.0
    %145 = vmatpush1.msra.mxu0 1.0
    %146 = vmatprep.subr.mxu0 0.0
    %147 = vmatpush1.msra.mxu0 1.0
    %148 = vmatprep.subr.mxu0 0.0
    %149 = vmatpush1.msra.mxu0 0.0
    %150 = vmatprep.subr.mxu0 0.0
    %151 = vmatpush1.msra.mxu0 0.0
    %152 = vmatprep.subr.mxu0 0.0
    %153 = vmatpush1.msra.mxu0 0.0
    %154 = vmatprep.subr.mxu0 0.0
    %155 = vmatpush1.msra.mxu0 0.0
    %156 = vmatprep.subr.mxu0 0.0
    %157 = vmatpush1.msra.mxu0 0.0
    %158 = vmatprep.subr.mxu0 0.0
    %159 = vmatpush1.msra.mxu0 0.0
    %160 = vmatprep.subr.mxu0 0.0
    %161 = vmatpush1.msra.mxu0 0.0
    %162 = vmatprep.subr.mxu0 0.0
    %163 = vmatpush1.msra.mxu0 0.0
    %164 = vmatprep.subr.mxu0 0.0
    %165 = vmatpush1.msra.mxu0 0.0
    %166 = vmatprep.subr.mxu0 0.0
    %167 = vmatpush1.msra.mxu0 0.0
    %168 = vmatprep.subr.mxu0 0.0
    %169 = vmatpush1.msra.mxu0 0.0
    %170 = vmatprep.subr.mxu0 0.0
    %171 = vmatpush1.msra.mxu0 0.0
    %172 = vmatprep.subr.mxu0 0.0
    %173 = vmatpush1.msra.mxu0 0.0
    %174 = vmatprep.subr.mxu0 0.0
    %175 = vmatpush1.msra.mxu0 0.0
    %176 = vmatprep.subr.mxu0 0.0
    %177 = vmatpush1.msra.mxu0 0.0
    %178 = vmatprep.subr.mxu0 0.0
    %179 = vmatpush1.msra.mxu0 0.0
    %180 = vmatprep.subr.mxu0 0.0
    %181 = vmatpush1.msra.mxu0 0.0
    %182 = vmatprep.subr.mxu0 0.0
    %183 = vmatpush1.msra.mxu0 0.0
    %184 = vmatprep.subr.mxu0 0.0
    %185 = vmatpush1.msra.mxu0 0.0
    %186 = vmatprep.subr.mxu0 0.0
    %187 = vmatpush1.msra.mxu0 0.0
    %188 = vmatprep.subr.mxu0 0.0
    %189 = vmatpush1.msra.mxu0 0.0
    %190 = vmatprep.subr.mxu0 0.0
    %191 = vmatpush1.msra.mxu0 0.0
    %192 = vmatprep.subr.mxu0 0.0
    %193 = vmatpush1.msra.mxu0 0.0
    %194 = vmatprep.subr.mxu0 0.0
    %195 = vmatpush1.msra.mxu0 0.0
    %196 = vmatprep.subr.mxu0 0.0
    %197 = vmatpush1.msra.mxu0 0.0
    %198 = vmatprep.subr.mxu0 0.0
    %199 = vmatpush1.msra.mxu0 0.0
    %200 = vmatprep.subr.mxu0 0.0
    %201 = vmatpush1.msra.mxu0 0.0
    %202 = vmatprep.subr.mxu0 0.0
    %203 = vmatpush1.msra.mxu0 0.0
    %204 = vmatprep.subr.mxu0 0.0
    %205 = vmatpush1.msra.mxu0 0.0
    %206 = vmatprep.subr.mxu0 0.0
    %207 = vmatpush1.msra.mxu0 0.0
    %208 = vmatprep.mubr.f32.mxu0 0.0
    %209 = vmatmul.mubr.f32.gmra.mrb[0].mxu0 %v139
    %v210 = vpop.f32.mrb[0].mxu0
    %v211 = vadd.f32 0.0, %v210
    %v212 = vpop.f32.mrb[0].mxu0
    %213 = vmatprep.mubr.f32.mxu0 0.0
    %214 = vmatmul.mubr.f32.gmra.mrb[0].mxu0 %v142
    %v215 = vpop.f32.mrb[0].mxu0
    %v216 = vadd.f32 0.0, %v215
    %v217 = vpop.f32.mrb[0].mxu0
    %218 = vdwg.mxu0
    %vm219 = vcmp.gt.f32.partialorder %v211, 0.0
    %vm220 = vcmp.gt.f32.partialorder %v216, 0.0
    %v221 = vrsqrt.pop %v211
    %v222 = vrsqrt.pop %v216
    %v223 = vsel %vm219, %v221, 0.0
    %v224 = vsel %vm220, %v222, 0.0
    %v225 = vlaneseq
    %v226 = vand.u32 %v225, 127
    %vm227 = vcmp.lt.s32.totalorder %v226, 8
    %v228 = vsel %vm227, 1, 0
    %vm229 = vcmp.eq.s32.totalorder %v228, 1
    %231 = vset.pattern.permute.xlu0 0
    %232 = vperm.xlu0 %231, %v223
    %v233 = vpop.permute.xlu0 %232
    %236 = vset.pattern.permute.xlu0 0
    %237 = vperm.xlu0 %236, %v224
    %v238 = vpop.permute.xlu0 %237
    %v240 = vsel %vm229, %v233, 1.0
    %v241 = vsel %vm229, %v238, 1.0
    %v242 = vmul.f32 %v97, %v240
    %v243 = vmul.f32 %v102, %v241
    %244 = vmatprep.subr.mxu0 0.0
    %245 = vmatpush1.msra.mxu0 %v242
    %246 = vmatprep.subr.mxu0 0.0
    %247 = vmatpush1.msra.mxu0 %v243
    %248 = vmatprep.subr.mxu0 0.0
    %249 = vmatpush1.msra.mxu0 0.0
    %250 = vmatprep.subr.mxu0 0.0
    %251 = vmatpush1.msra.mxu0 0.0
    %252 = vmatprep.subr.mxu0 0.0
    %253 = vmatpush1.msra.mxu0 0.0
    %254 = vmatprep.subr.mxu0 0.0
    %255 = vmatpush1.msra.mxu0 0.0
    %256 = vmatprep.subr.mxu0 0.0
    %257 = vmatpush1.msra.mxu0 0.0
    %258 = vmatprep.subr.mxu0 0.0
    %259 = vmatpush1.msra.mxu0 0.0
    %260 = vmatprep.subr.mxu0 0.0
    %261 = vmatpush1.msra.mxu0 0.0
    %262 = vmatprep.subr.mxu0 0.0
    %263 = vmatpush1.msra.mxu0 0.0
    %264 = vmatprep.subr.mxu0 0.0
    %265 = vmatpush1.msra.mxu0 0.0
    %266 = vmatprep.subr.mxu0 0.0
    %267 = vmatpush1.msra.mxu0 0.0
    %268 = vmatprep.subr.mxu0 0.0
    %269 = vmatpush1.msra.mxu0 0.0
    %270 = vmatprep.subr.mxu0 0.0
    %271 = vmatpush1.msra.mxu0 0.0
    %272 = vmatprep.subr.mxu0 0.0
    %273 = vmatpush1.msra.mxu0 0.0
    %274 = vmatprep.subr.mxu0 0.0
    %275 = vmatpush1.msra.mxu0 0.0
    %276 = vmatprep.subr.mxu0 0.0
    %277 = vmatpush1.msra.mxu0 0.0
    %278 = vmatprep.subr.mxu0 0.0
    %279 = vmatpush1.msra.mxu0 0.0
    %280 = vmatprep.subr.mxu0 0.0
    %281 = vmatpush1.msra.mxu0 0.0
    %282 = vmatprep.subr.mxu0 0.0
    %283 = vmatpush1.msra.mxu0 0.0
    %284 = vmatprep.subr.mxu0 0.0
    %285 = vmatpush1.msra.mxu0 0.0
    %286 = vmatprep.subr.mxu0 0.0
    %287 = vmatpush1.msra.mxu0 0.0
    %288 = vmatprep.subr.mxu0 0.0
    %289 = vmatpush1.msra.mxu0 0.0
    %290 = vmatprep.subr.mxu0 0.0
    %291 = vmatpush1.msra.mxu0 0.0
    %292 = vmatprep.subr.mxu0 0.0
    %293 = vmatpush1.msra.mxu0 0.0
    %294 = vmatprep.subr.mxu0 0.0
    %295 = vmatpush1.msra.mxu0 0.0
    %296 = vmatprep.subr.mxu0 0.0
    %297 = vmatpush1.msra.mxu0 0.0
    %298 = vmatprep.subr.mxu0 0.0
    %299 = vmatpush1.msra.mxu0 0.0
    %300 = vmatprep.subr.mxu0 0.0
    %301 = vmatpush1.msra.mxu0 0.0
    %302 = vmatprep.subr.mxu0 0.0
    %303 = vmatpush1.msra.mxu0 0.0
    %304 = vmatprep.subr.mxu0 0.0
    %305 = vmatpush1.msra.mxu0 0.0
    %306 = vmatprep.subr.mxu0 0.0
    %307 = vmatpush1.msra.mxu0 0.0
    %308 = vmatprep.mubr.f32.mxu0 0.0
    %309 = vmatmul.mubr.f32.gmra.mrb[0].mxu0 %v139
    %v310 = vpop.f32.mrb[0].mxu0
    %v311 = vadd.f32 0.0, %v310
    %v312 = vpop.f32.mrb[0].mxu0
    %313 = vmatprep.mubr.f32.mxu0 0.0
    %314 = vmatmul.mubr.f32.gmra.mrb[0].mxu0 %v142
    %v315 = vpop.f32.mrb[0].mxu0
    %v316 = vadd.f32 0.0, %v315
    %v317 = vpop.f32.mrb[0].mxu0
    %318 = vdwg.mxu0
    %v319 = vmul.f32 %v233, %v311
    %v320 = vmul.f32 %v238, %v316
    %v321 = vlaneseq
    %v322 = vshrl.u32 %v321, 7
    %v323 = vsub.s32 0, %v322
    %v324 = vrot.slane %v22, %v323
    %v325 = vadd.f32 %v319, %v324
    %v326 = vadd.f32 %v320, %v324
    %328 = vrot.lane.b32.xlu0 %v21, 118
    %v329 = vpop.permute.xlu0 %328
    %332 = vrot.lane.b32.xlu0 %v324, 118
    %v333 = vpop.permute.xlu0 %332
    %v336 = vsel %vm23, %v325, 0
    %v339 = vsel %vm23, %v326, 0
    %341 = vmatprep.subr.mxu0 0.0
    %342 = vmatpush1.msra.mxu0 %v329
    %343 = vmatprep.subr.mxu0 0.0
    %344 = vmatpush1.msra.mxu0 0.0
    %345 = vmatprep.subr.mxu0 0.0
    %346 = vmatpush1.msra.mxu0 0.0
    %347 = vmatprep.subr.mxu0 0.0
    %348 = vmatpush1.msra.mxu0 0.0
    %349 = vmatprep.subr.mxu0 0.0
    %350 = vmatpush1.msra.mxu0 0.0
    %351 = vmatprep.subr.mxu0 0.0
    %352 = vmatpush1.msra.mxu0 0.0
    %353 = vmatprep.subr.mxu0 0.0
    %354 = vmatpush1.msra.mxu0 0.0
    %355 = vmatprep.subr.mxu0 0.0
    %356 = vmatpush1.msra.mxu0 0.0
    %357 = vmatprep.subr.mxu0 0.0
    %358 = vmatpush1.msra.mxu0 0.0
    %359 = vmatprep.subr.mxu0 0.0
    %360 = vmatpush1.msra.mxu0 0.0
    %361 = vmatprep.subr.mxu0 0.0
    %362 = vmatpush1.msra.mxu0 0.0
    %363 = vmatprep.subr.mxu0 0.0
    %364 = vmatpush1.msra.mxu0 0.0
    %365 = vmatprep.subr.mxu0 0.0
    %366 = vmatpush1.msra.mxu0 0.0
    %367 = vmatprep.subr.mxu0 0.0
    %368 = vmatpush1.msra.mxu0 0.0
    %369 = vmatprep.subr.mxu0 0.0
    %370 = vmatpush1.msra.mxu0 0.0
    %371 = vmatprep.subr.mxu0 0.0
    %372 = vmatpush1.msra.mxu0 0.0
    %373 = vmatprep.subr.mxu0 0.0
    %374 = vmatpush1.msra.mxu0 0.0
    %375 = vmatprep.subr.mxu0 0.0
    %376 = vmatpush1.msra.mxu0 0.0
    %377 = vmatprep.subr.mxu0 0.0
    %378 = vmatpush1.msra.mxu0 0.0
    %379 = vmatprep.subr.mxu0 0.0
    %380 = vmatpush1.msra.mxu0 0.0
    %381 = vmatprep.subr.mxu0 0.0
    %382 = vmatpush1.msra.mxu0 0.0
    %383 = vmatprep.subr.mxu0 0.0
    %384 = vmatpush1.msra.mxu0 0.0
    %385 = vmatprep.subr.mxu0 0.0
    %386 = vmatpush1.msra.mxu0 0.0
    %387 = vmatprep.subr.mxu0 0.0
    %388 = vmatpush1.msra.mxu0 0.0
    %389 = vmatprep.subr.mxu0 0.0
    %390 = vmatpush1.msra.mxu0 0.0
    %391 = vmatprep.subr.mxu0 0.0
    %392 = vmatpush1.msra.mxu0 0.0
    %393 = vmatprep.subr.mxu0 0.0
    %394 = vmatpush1.msra.mxu0 0.0
    %395 = vmatprep.subr.mxu0 0.0
    %396 = vmatpush1.msra.mxu0 0.0
    %397 = vmatprep.subr.mxu0 0.0
    %398 = vmatpush1.msra.mxu0 0.0
    %399 = vmatprep.subr.mxu0 0.0
    %400 = vmatpush1.msra.mxu0 0.0
    %401 = vmatprep.subr.mxu0 0.0
    %402 = vmatpush1.msra.mxu0 0.0
    %403 = vmatprep.subr.mxu0 0.0
    %404 = vmatpush1.msra.mxu0 0.0
    %405 = vmatprep.mubr.f32.mxu0 0.0
    %406 = vmatmul.mubr.f32.gmra.mrb[0].mxu0 %v336
    %v407 = vpop.f32.mrb[0].mxu0
    %v408 = vadd.f32 %v333, %v407
    %v409 = vpop.f32.mrb[0].mxu0
    %410 = vmatprep.mubr.f32.mxu0 0.0
    %411 = vmatmul.mubr.f32.gmra.mrb[0].mxu0 %v339
    %v412 = vpop.f32.mrb[0].mxu0
    %v413 = vadd.f32 %v333, %v412
    %v414 = vpop.f32.mrb[0].mxu0
    %415 = vdwg.mxu0
    %vm416 = vcmp.ge.f32.partialorder %v408, 0.0
    %vm417 = vcmp.ge.f32.partialorder %v413, 0.0
    %v418 = vmul.f32 %v408, 0.01
    %v419 = vmul.f32 %v413, 0.01
    %v420 = vsel %vm416, %v408, %v418
    %v421 = vsel %vm417, %v413, %v419
    %vm422 = vcmask 15360
    %v423 = vsel %vm422, %v420, -inf
    %v424 = vsel %vm422, %v421, -inf
    %v425 = vmax.f32 %v423, %v424
    %v426 = vrot.slane %v425, 4
    %v427 = vmax.f32 %v425, %v426
    %v428 = vrot.slane %v427, 2
    %v429 = vmax.f32 %v427, %v428
    %v430 = vrot.slane %v429, 1
    %v431 = vmax.f32 %v429, %v430
    %v432 = vsub.f32 %v420, %v431
    %v433 = vsub.f32 %v421, %v431
    %v434 = vmul.f32 %v432, 1.442695
    %v435 = vpow.pop %v434
    %v436 = vmul.f32 %v433, 1.442695
    %v437 = vpow.pop %v436
    %439 = vset.pattern.permute.xlu0 0
    %440 = vperm.xlu0 %439, %v435
    %v441 = vpop.permute.xlu0 %440
    %444 = vset.pattern.permute.xlu0 0
    %445 = vperm.xlu0 %444, %v437
    %v446 = vpop.permute.xlu0 %445
    %v448 = vmul.f32 %v325, %v441
    %v449 = vmul.f32 %v326, %v446
    %450 = vst.msk [vmem:[#allocation2] sm:$0xff] %vm23, %v448
    %451 = vst.msk [vmem:[#allocation2 + $0x8] sm:$0xff] %vm23, %v449
    %452 = vset.pattern.permute.xlu0 1
    %453 = vperm.xlu0 %452, %v435
    %v454 = vpop.permute.xlu0 %453
    %456 = vset.pattern.permute.xlu0 1
    %457 = vperm.xlu0 %456, %v437
    %v458 = vpop.permute.xlu0 %457
    %v460 = vmul.f32 %v325, %v454
    %v461 = vmul.f32 %v326, %v458
    %464 = vrot.lane.b32.xlu0 %v460, 8
    %v465 = vpop.permute.xlu0 %464
    %466 = vrot.lane.b32.xlu0 %v461, 8
    %v467 = vpop.permute.xlu0 %466
    %vm470 = vcmask 130112
    %471 = vst.msk [vmem:[#allocation2] sm:$0xff] %vm470, %v465
    %472 = vst.msk [vmem:[#allocation2 + $0x8] sm:$0xff] %vm470, %v467
    %473 = vrot.lane.b32.xlu0 %v435, 16
    %v474 = vpop.permute.xlu0 %473
    %475 = vrot.lane.b32.xlu0 %v437, 16
    %v476 = vpop.permute.xlu0 %475
    %vm479 = vcmask 146560
    %480 = vst.msk [vmem:[#allocation2] sm:$0xff] %vm479, %v474
    %481 = vst.msk [vmem:[#allocation2 + $0x8] sm:$0xff] %vm479, %v476
    %vm482 = vcmask 154768
    %483 = vst.msk [vmem:[#allocation2] sm:$0xff] %vm482, 1.0
    %484 = vst.msk [vmem:[#allocation2 + $0x8] sm:$0xff] %vm482, 1.0
    %v485 = vld [vmem:[#allocation2] sm:$0xff]
    %v486 = vld [vmem:[#allocation2 + $0x8] sm:$0xff]
    %v488 = vsel %vm137, %v19, 0
    %v491 = vsel %vm137, %v20, 0
    %493 = vmatprep.subr.mxu0 0.0
    %494 = vmatpush1.msra.mxu0 %v485
    %495 = vmatprep.subr.mxu0 0.0
    %496 = vmatpush1.msra.mxu0 %v486
    %497 = vmatprep.subr.mxu0 0.0
    %498 = vmatpush1.msra.mxu0 0.0
    %499 = vmatprep.subr.mxu0 0.0
    %500 = vmatpush1.msra.mxu0 0.0
    %501 = vmatprep.subr.mxu0 0.0
    %502 = vmatpush1.msra.mxu0 0.0
    %503 = vmatprep.subr.mxu0 0.0
    %504 = vmatpush1.msra.mxu0 0.0
    %505 = vmatprep.subr.mxu0 0.0
    %506 = vmatpush1.msra.mxu0 0.0
    %507 = vmatprep.subr.mxu0 0.0
    %508 = vmatpush1.msra.mxu0 0.0
    %509 = vmatprep.subr.mxu0 0.0
    %510 = vmatpush1.msra.mxu0 0.0
    %511 = vmatprep.subr.mxu0 0.0
    %512 = vmatpush1.msra.mxu0 0.0
    %513 = vmatprep.subr.mxu0 0.0
    %514 = vmatpush1.msra.mxu0 0.0
    %515 = vmatprep.subr.mxu0 0.0
    %516 = vmatpush1.msra.mxu0 0.0
    %517 = vmatprep.subr.mxu0 0.0
    %518 = vmatpush1.msra.mxu0 0.0
    %519 = vmatprep.subr.mxu0 0.0
    %520 = vmatpush1.msra.mxu0 0.0
    %521 = vmatprep.subr.mxu0 0.0
    %522 = vmatpush1.msra.mxu0 0.0
    %523 = vmatprep.subr.mxu0 0.0
    %524 = vmatpush1.msra.mxu0 0.0
    %525 = vmatprep.subr.mxu0 0.0
    %526 = vmatpush1.msra.mxu0 0.0
    %527 = vmatprep.subr.mxu0 0.0
    %528 = vmatpush1.msra.mxu0 0.0
    %529 = vmatprep.subr.mxu0 0.0
    %530 = vmatpush1.msra.mxu0 0.0
    %531 = vmatprep.subr.mxu0 0.0
    %532 = vmatpush1.msra.mxu0 0.0
    %533 = vmatprep.subr.mxu0 0.0
    %534 = vmatpush1.msra.mxu0 0.0
    %535 = vmatprep.subr.mxu0 0.0
    %536 = vmatpush1.msra.mxu0 0.0
    %537 = vmatprep.subr.mxu0 0.0
    %538 = vmatpush1.msra.mxu0 0.0
    %539 = vmatprep.subr.mxu0 0.0
    %540 = vmatpush1.msra.mxu0 0.0
    %541 = vmatprep.subr.mxu0 0.0
    %542 = vmatpush1.msra.mxu0 0.0
    %543 = vmatprep.subr.mxu0 0.0
    %544 = vmatpush1.msra.mxu0 0.0
    %545 = vmatprep.subr.mxu0 0.0
    %546 = vmatpush1.msra.mxu0 0.0
    %547 = vmatprep.subr.mxu0 0.0
    %548 = vmatpush1.msra.mxu0 0.0
    %549 = vmatprep.subr.mxu0 0.0
    %550 = vmatpush1.msra.mxu0 0.0
    %551 = vmatprep.subr.mxu0 0.0
    %552 = vmatpush1.msra.mxu0 0.0
    %553 = vmatprep.subr.mxu0 0.0
    %554 = vmatpush1.msra.mxu0 0.0
    %555 = vmatprep.subr.mxu0 0.0
    %556 = vmatpush1.msra.mxu0 0.0
    %557 = vmatprep.mubr.f32.mxu0 0.0
    %558 = vmatmul.mubr.f32.gmra.mrb[0].mxu0 %v488
    %v559 = vpop.f32.mrb[0].mxu0
    %v560 = vadd.f32 0.0, %v559
    %v561 = vpop.f32.mrb[0].mxu0
    %562 = vmatprep.mubr.f32.mxu0 0.0
    %563 = vmatmul.mubr.f32.gmra.mrb[0].mxu0 %v491
    %v564 = vpop.f32.mrb[0].mxu0
    %v565 = vadd.f32 0.0, %v564
    %v566 = vpop.f32.mrb[0].mxu0
    %567 = vdwg.mxu0
    %v568 = vadd.f32 %v560, 1e-16
    %v569 = vadd.f32 %v565, 1e-16
    %571 = vset.pattern.permute.xlu0 16
    %572 = vperm.xlu0 %571, %v568
    %v573 = vpop.permute.xlu0 %572
    %576 = vset.pattern.permute.xlu0 16
    %577 = vperm.xlu0 %576, %v569
    %v578 = vpop.permute.xlu0 %577
    %v580 = vrcp.pop %v573
    %v581 = vmul.f32 %v560, %v580
    %v582 = vrcp.pop %v578
    %v583 = vmul.f32 %v565, %v582
    %584 = vset.pattern.permute.xlu0 17
    %585 = vperm.xlu0 %584, %v568
    %v586 = vpop.permute.xlu0 %585
    %588 = vset.pattern.permute.xlu0 17
    %589 = vperm.xlu0 %588, %v569
    %v590 = vpop.permute.xlu0 %589
    %v592 = vrcp.pop %v586
    %v593 = vmul.f32 %v560, %v592
    %v594 = vrcp.pop %v590
    %v595 = vmul.f32 %v565, %v594
    %v596 = vsub.f32 %v581, %v325
    %v597 = vsub.f32 %v583, %v326
    %v598 = vand.u32 2147483647, %v596
    %v599 = vand.u32 2147483647, %v597
    %v600 = vsel %vm23, %v598, 0.0
    %601 = vadd.xlane.f32.xlu0 %v600
    %v602 = vpop.xlane.xlu0 %601
    %v603 = vsel %vm23, %v599, 0.0
    %604 = vadd.xlane.f32.xlu0 %v603
    %v605 = vpop.xlane.xlu0 %604
    %606 = vrot.lane.b32.xlu0 %v325, 8
    %v607 = vpop.permute.xlu0 %606
    %608 = vrot.lane.b32.xlu0 %v326, 8
    %v609 = vpop.permute.xlu0 %608
    %v612 = vsub.f32 %v593, %v607
    %v613 = vsub.f32 %v595, %v609
    %v614 = vand.u32 2147483647, %v612
    %v615 = vand.u32 2147483647, %v613
    %618 = vrot.lane.b32.xlu0 %v614, 120
    %v619 = vpop.permute.xlu0 %618
    %620 = vrot.lane.b32.xlu0 %v615, 120
    %v621 = vpop.permute.xlu0 %620
    %v624 = vsel %vm23, %v619, 0.0
    %625 = vadd.xlane.f32.xlu0 %v624
    %v626 = vpop.xlane.xlu0 %625
    %v627 = vsel %vm23, %v621, 0.0
    %628 = vadd.xlane.f32.xlu0 %v627
    %v629 = vpop.xlane.xlu0 %628
    %630 = vxpose.xlu0.b32.start [1/16] %v325, 128
    %631 = vxpose.xlu0.b32.cont [2/16] %v326, 128
    %632 = vxpose.xlu0.b32.cont [3/16] 0.0, 128
    %633 = vxpose.xlu0.b32.cont [4/16] 0.0, 128
    %634 = vxpose.xlu0.b32.cont [5/16] 0.0, 128
    %635 = vxpose.xlu0.b32.cont [6/16] 0.0, 128
    %636 = vxpose.xlu0.b32.cont [7/16] 0.0, 128
    %637 = vxpose.xlu0.b32.cont [8/16] 0.0, 128
    %638 = vxpose.xlu0.b32.cont [9/16] 0.0, 128
    %639 = vxpose.xlu0.b32.cont [10/16] 0.0, 128
    %640 = vxpose.xlu0.b32.cont [11/16] 0.0, 128
    %641 = vxpose.xlu0.b32.cont [12/16] 0.0, 128
    %642 = vxpose.xlu0.b32.cont [13/16] 0.0, 128
    %643 = vxpose.xlu0.b32.cont [14/16] 0.0, 128
    %644 = vxpose.xlu0.b32.cont [15/16] 0.0, 128
    %645 = vxpose.xlu0.b32.end [16/16] 0.0, 128
    %v646 = vpop.trf.xlu0
    %v647 = vpop.trf.xlu0
    %v648 = vpop.trf.xlu0
    %v649 = vpop.trf.xlu0
    %v650 = vpop.trf.xlu0
    %v651 = vpop.trf.xlu0
    %v652 = vpop.trf.xlu0
    %v653 = vpop.trf.xlu0
    %v654 = vpop.trf.xlu0
    %v655 = vpop.trf.xlu0
    %v656 = vpop.trf.xlu0
    %v657 = vpop.trf.xlu0
    %v658 = vpop.trf.xlu0
    %v659 = vpop.trf.xlu0
    %v660 = vpop.trf.xlu0
    %v661 = vpop.trf.xlu0
    %663 = vset.pattern.permute.xlu0 8
    %664 = vperm.xlu0 %663, %v593
    %v665 = vpop.permute.xlu0 %664
    %668 = vset.pattern.permute.xlu0 8
    %669 = vperm.xlu0 %668, %v595
    %v670 = vpop.permute.xlu0 %669
    %v672 = vlaneseq
    %v673 = vshrl.u32 %v672, 7
    %v674 = vsub.s32 0, %v673
    %v675 = vrot.slane %v646, %v674
    %v676 = vsub.f32 %v665, %v675
    %v677 = vsub.f32 %v670, %v675
    %v678 = vand.u32 2147483647, %v676
    %v679 = vand.u32 2147483647, %v677
    %v680 = vmul.f32 %v19, %v678
    %v681 = vmul.f32 %v20, %v679
    %v682 = vsel %vm137, %v680, 0.0
    %683 = vadd.xlane.f32.xlu0 %v682
    %v684 = vpop.xlane.xlu0 %683
    %v685 = vsel %vm137, %v681, 0.0
    %686 = vadd.xlane.f32.xlu0 %v685
    %v687 = vpop.xlane.xlu0 %686
    %v688 = vadd.f32 %v684, 0.0
    %v689 = vadd.f32 %v687, 0.0
    %690 = vset.pattern.permute.xlu0 9
    %691 = vperm.xlu0 %690, %v593
    %v692 = vpop.permute.xlu0 %691
    %694 = vset.pattern.permute.xlu0 9
    %695 = vperm.xlu0 %694, %v595
    %v696 = vpop.permute.xlu0 %695
    %v698 = vlaneseq
    %v699 = vshrl.u32 %v698, 7
    %v700 = vsub.s32 1, %v699
    %v701 = vrot.slane %v646, %v700
    %v702 = vsub.f32 %v692, %v701
    %v703 = vsub.f32 %v696, %v701
    %v704 = vand.u32 2147483647, %v702
    %v705 = vand.u32 2147483647, %v703
    %v706 = vmul.f32 %v19, %v704
    %v707 = vmul.f32 %v20, %v705
    %v708 = vsel %vm137, %v706, 0.0
    %709 = vadd.xlane.f32.xlu0 %v708
    %v710 = vpop.xlane.xlu0 %709
    %v711 = vsel %vm137, %v707, 0.0
    %712 = vadd.xlane.f32.xlu0 %v711
    %v713 = vpop.xlane.xlu0 %712
    %v714 = vadd.f32 %v688, %v710
    %v715 = vadd.f32 %v689, %v713
    %716 = vset.pattern.permute.xlu0 10
    %717 = vperm.xlu0 %716, %v593
    %v718 = vpop.permute.xlu0 %717
    %720 = vset.pattern.permute.xlu0 10
    %721 = vperm.xlu0 %720, %v595
    %v722 = vpop.permute.xlu0 %721
    %v724 = vlaneseq
    %v725 = vshrl.u32 %v724, 7
    %v726 = vsub.s32 2, %v725
    %v727 = vrot.slane %v646, %v726
    %v728 = vsub.f32 %v718, %v727
    %v729 = vsub.f32 %v722, %v727
    %v730 = vand.u32 2147483647, %v728
    %v731 = vand.u32 2147483647, %v729
    %v732 = vmul.f32 %v19, %v730
    %v733 = vmul.f32 %v20, %v731
    %v734 = vsel %vm137, %v732, 0.0
    %735 = vadd.xlane.f32.xlu0 %v734
    %v736 = vpop.xlane.xlu0 %735
    %v737 = vsel %vm137, %v733, 0.0
    %738 = vadd.xlane.f32.xlu0 %v737
    %v739 = vpop.xlane.xlu0 %738
    %v740 = vadd.f32 %v714, %v736
    %v741 = vadd.f32 %v715, %v739
    %742 = vset.pattern.permute.xlu0 11
    %743 = vperm.xlu0 %742, %v593
    %v744 = vpop.permute.xlu0 %743
    %746 = vset.pattern.permute.xlu0 11
    %747 = vperm.xlu0 %746, %v595
    %v748 = vpop.permute.xlu0 %747
    %v750 = vlaneseq
    %v751 = vshrl.u32 %v750, 7
    %v752 = vsub.s32 3, %v751
    %v753 = vrot.slane %v646, %v752
    %v754 = vsub.f32 %v744, %v753
    %v755 = vsub.f32 %v748, %v753
    %v756 = vand.u32 2147483647, %v754
    %v757 = vand.u32 2147483647, %v755
    %v758 = vmul.f32 %v19, %v756
    %v759 = vmul.f32 %v20, %v757
    %v760 = vsel %vm137, %v758, 0.0
    %761 = vadd.xlane.f32.xlu0 %v760
    %v762 = vpop.xlane.xlu0 %761
    %v763 = vsel %vm137, %v759, 0.0
    %764 = vadd.xlane.f32.xlu0 %v763
    %v765 = vpop.xlane.xlu0 %764
    %v766 = vadd.f32 %v740, %v762
    %v767 = vadd.f32 %v741, %v765
    %768 = vset.pattern.permute.xlu0 12
    %769 = vperm.xlu0 %768, %v593
    %v770 = vpop.permute.xlu0 %769
    %772 = vset.pattern.permute.xlu0 12
    %773 = vperm.xlu0 %772, %v595
    %v774 = vpop.permute.xlu0 %773
    %v776 = vlaneseq
    %v777 = vshrl.u32 %v776, 7
    %v778 = vsub.s32 4, %v777
    %v779 = vrot.slane %v646, %v778
    %v780 = vsub.f32 %v770, %v779
    %v781 = vsub.f32 %v774, %v779
    %v782 = vand.u32 2147483647, %v780
    %v783 = vand.u32 2147483647, %v781
    %v784 = vmul.f32 %v19, %v782
    %v785 = vmul.f32 %v20, %v783
    %v786 = vsel %vm137, %v784, 0.0
    %787 = vadd.xlane.f32.xlu0 %v786
    %v788 = vpop.xlane.xlu0 %787
    %v789 = vsel %vm137, %v785, 0.0
    %790 = vadd.xlane.f32.xlu0 %v789
    %v791 = vpop.xlane.xlu0 %790
    %v792 = vadd.f32 %v766, %v788
    %v793 = vadd.f32 %v767, %v791
    %794 = vset.pattern.permute.xlu0 13
    %795 = vperm.xlu0 %794, %v593
    %v796 = vpop.permute.xlu0 %795
    %798 = vset.pattern.permute.xlu0 13
    %799 = vperm.xlu0 %798, %v595
    %v800 = vpop.permute.xlu0 %799
    %v802 = vlaneseq
    %v803 = vshrl.u32 %v802, 7
    %v804 = vsub.s32 5, %v803
    %v805 = vrot.slane %v646, %v804
    %v806 = vsub.f32 %v796, %v805
    %v807 = vsub.f32 %v800, %v805
    %v808 = vand.u32 2147483647, %v806
    %v809 = vand.u32 2147483647, %v807
    %v810 = vmul.f32 %v19, %v808
    %v811 = vmul.f32 %v20, %v809
    %v812 = vsel %vm137, %v810, 0.0
    %813 = vadd.xlane.f32.xlu0 %v812
    %v814 = vpop.xlane.xlu0 %813
    %v815 = vsel %vm137, %v811, 0.0
    %816 = vadd.xlane.f32.xlu0 %v815
    %v817 = vpop.xlane.xlu0 %816
    %v818 = vadd.f32 %v792, %v814
    %v819 = vadd.f32 %v793, %v817
    %820 = vset.pattern.permute.xlu0 14
    %821 = vperm.xlu0 %820, %v593
    %v822 = vpop.permute.xlu0 %821
    %824 = vset.pattern.permute.xlu0 14
    %825 = vperm.xlu0 %824, %v595
    %v826 = vpop.permute.xlu0 %825
    %v828 = vlaneseq
    %v829 = vshrl.u32 %v828, 7
    %v830 = vsub.s32 6, %v829
    %v831 = vrot.slane %v646, %v830
    %v832 = vsub.f32 %v822, %v831
    %v833 = vsub.f32 %v826, %v831
    %v834 = vand.u32 2147483647, %v832
    %v835 = vand.u32 2147483647, %v833
    %v836 = vmul.f32 %v19, %v834
    %v837 = vmul.f32 %v20, %v835
    %v838 = vsel %vm137, %v836, 0.0
    %839 = vadd.xlane.f32.xlu0 %v838
    %v840 = vpop.xlane.xlu0 %839
    %v841 = vsel %vm137, %v837, 0.0
    %842 = vadd.xlane.f32.xlu0 %v841
    %v843 = vpop.xlane.xlu0 %842
    %v844 = vadd.f32 %v818, %v840
    %v845 = vadd.f32 %v819, %v843
    %846 = vset.pattern.permute.xlu0 15
    %847 = vperm.xlu0 %846, %v593
    %v848 = vpop.permute.xlu0 %847
    %850 = vset.pattern.permute.xlu0 15
    %851 = vperm.xlu0 %850, %v595
    %v852 = vpop.permute.xlu0 %851
    %v854 = vlaneseq
    %v855 = vshrl.u32 %v854, 7
    %v856 = vsub.s32 7, %v855
    %v857 = vrot.slane %v646, %v856
    %v858 = vsub.f32 %v848, %v857
    %v859 = vsub.f32 %v852, %v857
    %v860 = vand.u32 2147483647, %v858
    %v861 = vand.u32 2147483647, %v859
    %v862 = vmul.f32 %v19, %v860
    %v863 = vmul.f32 %v20, %v861
    %v864 = vsel %vm137, %v862, 0.0
    %865 = vadd.xlane.f32.xlu0 %v864
    %v866 = vpop.xlane.xlu0 %865
    %v867 = vsel %vm137, %v863, 0.0
    %868 = vadd.xlane.f32.xlu0 %v867
    %v869 = vpop.xlane.xlu0 %868
    %v870 = vadd.f32 %v844, %v866
    %v871 = vadd.f32 %v845, %v869
    %v872 = vsub.f32 %v870, %v626
    %v873 = vsub.f32 %v871, %v629
    %v874 = vsub.f32 %v560, 1.0
    %v875 = vsub.f32 %v565, 1.0
    %v876 = vmul.f32 %v874, %v602
    %v877 = vmul.f32 %v875, %v605
    %v878 = vsub.f32 %v876, %v872
    %v879 = vsub.f32 %v877, %v873
    %882 = vrot.lane.b32.xlu0 %v97, 1
    %v883 = vpop.permute.xlu0 %882
    %884 = vrot.lane.b32.xlu0 %v102, 1
    %v885 = vpop.permute.xlu0 %884
    %v888 = vadd.f32 %v311, %v883
    %v889 = vadd.f32 %v316, %v885
    %890 = vrot.lane.b32.xlu0 %v324, 1
    %v891 = vpop.permute.xlu0 %890
    %v893 = vadd.f32 %v888, %v891
    %v894 = vadd.f32 %v889, %v891
    %v895 = vxor.u32 %v893, 2147483648
    %v896 = vxor.u32 %v894, 2147483648
    %v897 = vmul.f32 %v895, 1.442695
    %v898 = vpow.pop %v897
    %v899 = vmul.f32 %v896, 1.442695
    %v900 = vpow.pop %v899
    %v901 = vadd.f32 %v898, 1.0
    %v902 = vadd.f32 %v900, 1.0
    %v903 = vrcp.pop %v901
    %v904 = vmul.f32 1.0, %v903
    %v905 = vrcp.pop %v902
    %v906 = vmul.f32 1.0, %v905
    %909 = vrot.lane.b32.xlu0 %v904, 119
    %v910 = vpop.permute.xlu0 %909
    %911 = vrot.lane.b32.xlu0 %v906, 119
    %v912 = vpop.permute.xlu0 %911
    %vm915 = vcmask 7168
    %916 = vst.msk [vmem:[#allocation2] sm:$0xff] %vm915, %v910
    %917 = vst.msk [vmem:[#allocation2 + $0x8] sm:$0xff] %vm915, %v912
    %920 = vrot.lane.b32.xlu0 %v878, 111
    %v921 = vpop.permute.xlu0 %920
    %922 = vrot.lane.b32.xlu0 %v879, 111
    %v923 = vpop.permute.xlu0 %922
    %vm926 = vcmask 15368
    %927 = vst.msk [vmem:[#allocation2] sm:$0xff] %vm926, %v921
    %928 = vst.msk [vmem:[#allocation2 + $0x8] sm:$0xff] %vm926, %v923
    %v929 = vld [vmem:[#allocation2] sm:$0xff]
    %v930 = vld [vmem:[#allocation2 + $0x8] sm:$0xff]
    %931 = vxpose.xlu0.b32.start [1/16] %v929, 128
    %932 = vxpose.xlu0.b32.cont [2/16] %v930, 128
    %933 = vxpose.xlu0.b32.cont [3/16] 0.0, 128
    %934 = vxpose.xlu0.b32.cont [4/16] 0.0, 128
    %935 = vxpose.xlu0.b32.cont [5/16] 0.0, 128
    %936 = vxpose.xlu0.b32.cont [6/16] 0.0, 128
    %937 = vxpose.xlu0.b32.cont [7/16] 0.0, 128
    %938 = vxpose.xlu0.b32.cont [8/16] 0.0, 128
    %939 = vxpose.xlu0.b32.cont [9/16] 0.0, 128
    %940 = vxpose.xlu0.b32.cont [10/16] 0.0, 128
    %941 = vxpose.xlu0.b32.cont [11/16] 0.0, 128
    %942 = vxpose.xlu0.b32.cont [12/16] 0.0, 128
    %943 = vxpose.xlu0.b32.cont [13/16] 0.0, 128
    %944 = vxpose.xlu0.b32.cont [14/16] 0.0, 128
    %945 = vxpose.xlu0.b32.cont [15/16] 0.0, 128
    %946 = vxpose.xlu0.b32.end [16/16] 0.0, 128
    %v947 = vpop.trf.xlu0
    %v948 = vpop.trf.xlu0
    %v949 = vpop.trf.xlu0
    %v950 = vpop.trf.xlu0
    %v951 = vpop.trf.xlu0
    %v952 = vpop.trf.xlu0
    %v953 = vpop.trf.xlu0
    %v954 = vpop.trf.xlu0
    %v955 = vpop.trf.xlu0
    %v956 = vpop.trf.xlu0
    %v957 = vpop.trf.xlu0
    %v958 = vpop.trf.xlu0
    %v959 = vpop.trf.xlu0
    %v960 = vpop.trf.xlu0
    %v961 = vpop.trf.xlu0
    %v962 = vpop.trf.xlu0
    %v963 = vmul.f32 %v947, 0.1
    %v965 = vrot.slane %v963, 1
    %v967 = vsub.f32 %v947, %v965
    %vm968 = vcmask 122880
    %969 = vst.msk [vmem:[#allocation3] sm:$0x1] %vm968, %v967
    // Predicated region
    $region14: #{tpu_custom_call.1} parent=1 // pred_check
      _
    $region15: #{tpu_custom_call.1} parent=1 // pred_check_branch
      %971 = sbr.rel (0) target = $region17
    $region16: #{tpu_custom_call.1} parent=1 // pred_region
      %s973 = ssub.s32 16, 16
      %974 = vsyncadd [#allocation4], %s973
      %s976 = sshll.u32 [#allocation3], 4
      %s977 = int_to_ptr.vmem [resolvable:$true] %s976
      %979 = dma.vmem_to_hbm [thread:$0]  %s977, 16, %s3, [#allocation4]
    $region17: #{tpu_custom_call.1} parent=1 // pred_fallthru
      _
    // Predicated region
    $region18: #{tpu_custom_call.1} parent=1 // pred_check
      _
    $region19: #{tpu_custom_call.1} parent=1 // pred_check_branch
      %981 = sbr.rel (0) target = $region21
    $region20: #{tpu_custom_call.1} parent=1 // pred_region
      %982 = dma.done [#allocation4], 16
    $region21: #{tpu_custom_call.1} parent=1 // pred_fallthru
      _
    %983 = vsyncpa [#allocation4], 1

</llo_original>
